<compile_context>
chip_gen: v7x
topology: tpu7x:2x2x1
jax: 0.10.0
libtpu: 0.0.40
codegen_flags: <defaults>
</compile_context>

<pallas_src>
import functools
import math

import jax
import jax.numpy as jnp
import numpy as np
from jax import lax
from jax.experimental import pallas as pl
from jax.experimental.pallas import tpu as pltpu

SQRT_HALF = 0.7071067811865476
BN_EPS = 1e-5
NBLOCKS = 2   # FeatureTransformer(nblocks=2)
NSUB = 2      # FeatureBlock(sub_block_size=2)


def feature_transformer_kernel(x_ref, w_ref, b_ref, gamma_ref, beta_ref, o_ref, *,
                               nblocks, n, ct, h, d):
    """One grid step processes a group of `ct` channels, fully lane-dense.

    x_ref     : (N, Ct, H*D) f32    lane-dense input (D == W == input_size)
    w_ref     : (NBLOCKS, H*D, 2*H*D) block-diagonal fused [value|gate] weight of
                the LAST sub-block of each FeatureBlock (dead sub-blocks removed)
    b_ref     : (NBLOCKS, 2*H*D)    fused bias (value half, then gate half)
    gamma_ref : (NBLOCKS, Ct, 1) f32 per-channel BN affine weight (VMEM)
    beta_ref  : (NBLOCKS, Ct, 1) f32 per-channel BN affine bias   (VMEM)
    o_ref     : (N, Ct, H*D) f32    lane-dense output
    """
    hd = h * d
    inv_count = 1.0 / (2.0 * n * h * d)      # BN sees N*H*(2D) elements per channel

    x = x_ref[...]                            # (N, Ct, HD)
    for blk in range(nblocks):                # static unroll over FeatureBlocks
        # One fused matmul per FeatureBlock: (N*Ct, HD) @ (HD, 2HD) on the MXU.
        x2 = x.reshape(n * ct, hd)
        y2 = jnp.dot(x2, w_ref[blk], preferred_element_type=jnp.float32) \
             + b_ref[blk][None, :]
        y = y2.reshape(n, ct, 2 * hd)         # (N, Ct, 2HD)

        # Vectorised two-pass per-channel BN statistics (training mode, biased var).
        s1 = jnp.sum(jnp.sum(y, axis=2, keepdims=True), axis=0, keepdims=True)
        mean = s1 * inv_count                 # (1, Ct, 1)
        yc = y - mean
        s2 = jnp.sum(jnp.sum(yc * yc, axis=2, keepdims=True), axis=0, keepdims=True)
        var = s2 * inv_count                  # (1, Ct, 1)

        scale = lax.rsqrt(var + BN_EPS) * gamma_ref[blk][None]   # (1, Ct, 1)
        ybn = yc * scale + beta_ref[blk][None]

        # GLU with the sigmoid on the EUP: sigmoid(g) = 0.5*(tanh(g/2) + 1).
        gate = 0.5 * (jnp.tanh(0.5 * ybn[..., hd:]) + 1.0)
        glu = ybn[..., :hd] * gate            # value half is already residual-layout
        # identity is the *block input* (literal PyTorch loop semantics).
        x = (glu + x) * SQRT_HALF

    o_ref[...] = x


def _choose_ct(n, c, hd, budget_bytes=16 << 20):
    """Largest channel-group size Ct (divisor of C) whose per-step working set fits
    a conservative VMEM budget.  Single step (Ct == C) is preferred: v5e/v6e have a
    single TensorCore, so extra grid steps are pure per-step pipeline overhead for
    an overhead-bound kernel.  The budget counts double-buffered in+out blocks plus
    ~4 live (N, Ct, 2*HD) f32 temporaries and leaves headroom under the default
    scoped VMEM limit on all of v5e/v6e/v7x."""
    def step_bytes(t):
        return (4 + 8) * n * t * hd * 4
    if step_bytes(c) <= budget_bytes:
        return c
    fits = [t for t in range(1, c) if c % t == 0 and step_bytes(t) <= budget_bytes]
    pref = [t for t in fits if t % 8 == 0]    # keep the in-kernel reshape layout-clean
    if pref:
        return max(pref)
    return max(fits) if fits else 1


@jax.jit
def feature_transformer(x_nchw, params):
    """x_nchw: (N, C, H, W) float32 with C == W == input_size. Returns same shape."""
    w_full, b_full, gamma, beta = params
    n, c, h, w = x_nchw.shape
    d = w
    if c != d:
        raise ValueError("FeatureTransformer requires C == W == input_size")
    hd = h * d

    # Dead-sub-block elimination: only the last sub-block of each FeatureBlock
    # reaches the output, so only its parameters are needed (output-identical).
    used = np.asarray([blk * NSUB + (NSUB - 1) for blk in range(NBLOCKS)])
    wt = jnp.transpose(w_full[used], (0, 2, 1))   # (NBLOCKS, D, 2D): y = x @ W^T
    b_used = b_full[used]                         # (NBLOCKS, 2D)
    gamma3 = gamma[used][..., None]               # (NBLOCKS, C, 1)
    beta3 = beta[used][..., None]                 # (NBLOCKS, C, 1)

    # Block-diagonal lift of the per-row Linear: value columns first (h-major),
    # then gate columns.  Zero padding contributes exact zeros -> same numerics.
    eye_h = jnp.eye(h, dtype=jnp.float32)
    wbd_v = jnp.einsum('pq,bij->bpiqj', eye_h, wt[:, :, :d]).reshape(NBLOCKS, hd, hd)
    wbd_g = jnp.einsum('pq,bij->bpiqj', eye_h, wt[:, :, d:]).reshape(NBLOCKS, hd, hd)
    wbd = jnp.concatenate([wbd_v, wbd_g], axis=-1)              # (NBLOCKS, HD, 2HD)
    bbd = jnp.concatenate([jnp.tile(b_used[:, :d], (1, h)),
                           jnp.tile(b_used[:, d:], (1, h))], axis=-1)  # (NBLOCKS, 2HD)

    # Metadata-only relayout: last dim H*W (=128) -> unmasked, lane-dense accesses.
    xr = x_nchw.reshape(n, c, hd)

    ct = _choose_ct(n, c, hd)
    grid = (c // ct,)
    kernel = functools.partial(feature_transformer_kernel,
                               nblocks=NBLOCKS, n=n, ct=ct, h=h, d=d)

    # NOTE: with grid == (1,) double-buffering of the grid-invariant weight/bias is
    # moot; if the grid ever has >1 step they could use pipeline_mode=pl.Buffered(1).
    out = pl.pallas_call(
        kernel,
        out_shape=jax.ShapeDtypeStruct((n, c, hd), jnp.float32),
        grid=grid,
        in_specs=[
            pl.BlockSpec((n, ct, hd), lambda g: (0, g, 0)),            # x channel group
            pl.BlockSpec((NBLOCKS, hd, 2 * hd), lambda g: (0, 0, 0)),  # fused weights
            pl.BlockSpec((NBLOCKS, 2 * hd), lambda g: (0, 0)),         # fused biases
            pl.BlockSpec((NBLOCKS, ct, 1), lambda g: (0, g, 0)),       # BN gamma
            pl.BlockSpec((NBLOCKS, ct, 1), lambda g: (0, g, 0)),       # BN beta
        ],
        out_specs=pl.BlockSpec((n, ct, hd), lambda g: (0, g, 0)),
        compiler_params=pltpu.CompilerParams(
            dimension_semantics=("arbitrary",)),
    )(xr, wbd, bbd, gamma3, beta3)
    return out.reshape(n, c, h, d)


def init_params(key, input_size):
    """Deterministic params. Linear weight/bias: PyTorch-style uniform(+-1/sqrt(D));
    BN gamma/beta perturbed around (1, 0) so the affine path is exercised."""
    D = input_size
    NS = NBLOCKS * NSUB
    k = 1.0 / math.sqrt(D)
    keys = jax.random.split(key, 4)
    w_full = jax.random.uniform(keys[0], (NS, 2 * D, D), jnp.float32, -k, k)  # (out, in)
    b_full = jax.random.uniform(keys[1], (NS, 2 * D), jnp.float32, -k, k)
    gamma = 1.0 + 0.1 * jax.random.normal(keys[2], (NS, D), jnp.float32)       # C == D
    beta = 0.1 * jax.random.normal(keys[3], (NS, D), jnp.float32)
    return w_full, b_full, gamma, beta


def reference(x, params):
    """Pure-JAX reference with literal PyTorch loop semantics (computes every
    sub-block, demonstrating the dead-work elimination is output-identical)."""
    w_full, b_full, gamma, beta = params
    D = x.shape[-1]
    hp = lax.Precision.HIGHEST
    for blk in range(NBLOCKS):
        out = x
        for s in range(NSUB):
            idx = blk * NSUB + s
            y = jnp.einsum('nchw,ow->ncho', x, w_full[idx], precision=hp) + b_full[idx]
            mean = y.mean(axis=(0, 2, 3), keepdims=True)
            var = y.var(axis=(0, 2, 3), keepdims=True)      # biased, like training BN
            gam = gamma[idx][None, :, None, None]
            bet = beta[idx][None, :, None, None]
            ybn = (y - mean) * lax.rsqrt(var + BN_EPS) * gam + bet
            glu = ybn[..., :D] * jax.nn.sigmoid(ybn[..., D:])
            out = (glu + x) * SQRT_HALF
        x = out
    return x


if __name__ == "__main__":
    input_size = 16          # == C == W (BatchNorm2d + Linear jointly require this)
    N, H = 2, 8              # H*W = 128 -> lane-dense layout inside the kernel
    key = jax.random.PRNGKey(0)
    kx, kp = jax.random.split(key)
    x = jax.random.normal(kx, (N, input_size, H, input_size), jnp.float32)
    params = init_params(kp, input_size)

    out = jax.block_until_ready(feature_transformer(x, params))
    ref = jax.block_until_ready(reference(x, params))

    if not np.allclose(np.asarray(out), np.asarray(ref), rtol=1e-3, atol=1e-3):
        raise AssertionError(
            "kernel/reference mismatch, max abs diff = "
            f"{np.max(np.abs(np.asarray(out) - np.asarray(ref)))}")

    print("KERNEL_OK")
</pallas_src>

<mosaic_0001>
module attributes {stable_mosaic.version = 11 : i64} {
  func.func @feature_transformer_kernel(%arg0: i32, %arg1: memref<2x16x128xf32, #tpu.memory_space<vmem>>, %arg2: memref<2x128x256xf32, #tpu.memory_space<vmem>>, %arg3: memref<2x256xf32, #tpu.memory_space<vmem>>, %arg4: memref<2x16x1xf32, #tpu.memory_space<vmem>>, %arg5: memref<2x16x1xf32, #tpu.memory_space<vmem>>, %arg6: memref<2x16x128xf32, #tpu.memory_space<vmem>>) attributes {dimension_semantics = [#tpu.dimension_semantics<arbitrary>], iteration_bounds = array<i64: 1>, scalar_prefetch = 0 : i64, scratch_operands = 0 : i64, tpu.core_type = #tpu.core_type<tc>, window_params = [{transform_indices = @transform_0, window_bounds = array<i64: 2, 16, 128>}, {pipeline_mode = #tpu.pipeline_mode<synchronous>, transform_indices = @transform_1, window_bounds = array<i64: 2, 128, 256>}, {pipeline_mode = #tpu.pipeline_mode<synchronous>, transform_indices = @transform_2, window_bounds = array<i64: 2, 256>}, {transform_indices = @transform_3, window_bounds = array<i64: 2, 16, 1>}, {transform_indices = @transform_4, window_bounds = array<i64: 2, 16, 1>}, {transform_indices = @transform_5, window_bounds = array<i64: 2, 16, 128>}]} {
    %c0 = arith.constant 0 : index
    %c0_0 = arith.constant 0 : index
    %c0_1 = arith.constant 0 : index
    %0 = vector.load %arg1[%c0, %c0_0, %c0_1] : memref<2x16x128xf32, #tpu.memory_space<vmem>>, vector<2x16x128xf32>
    %1 = vector.shape_cast %0 : vector<2x16x128xf32> to vector<32x128xf32>
    %c0_2 = arith.constant 0 : index
    %c0_3 = arith.constant 0 : index
    %c0_4 = arith.constant 0 : index
    %2 = vector.load %arg2[%c0_2, %c0_3, %c0_4] : memref<2x128x256xf32, #tpu.memory_space<vmem>>, vector<1x128x256xf32>
    %3 = vector.shape_cast %2 : vector<1x128x256xf32> to vector<128x256xf32>
    %cst = arith.constant dense<0.000000e+00> : vector<32x256xf32>
    %4 = tpu.matmul %1, %3, %cst {dimension_numbers = #tpu.dot_dimension_numbers<[1], [0], [0], [1], [0, 0, 1, 1], [], []>} : vector<32x128xf32>, vector<128x256xf32>, vector<32x256xf32> -> vector<32x256xf32>
    %c0_5 = arith.constant 0 : index
    %c0_6 = arith.constant 0 : index
    %5 = vector.load %arg3[%c0_5, %c0_6] : memref<2x256xf32, #tpu.memory_space<vmem>>, vector<1x256xf32>
    %6 = vector.shape_cast %5 : vector<1x256xf32> to vector<256xf32>
    %7 = vector.shape_cast %6 : vector<256xf32> to vector<1x256xf32>
    %8 = vector.broadcast %7 : vector<1x256xf32> to vector<32x256xf32>
    %9 = arith.addf %4, %8 : vector<32x256xf32>
    %10 = vector.shape_cast %9 : vector<32x256xf32> to vector<2x16x256xf32>
    %cst_7 = arith.constant dense<0.000000e+00> : vector<2x16xf32>
    %11 = vector.multi_reduction <add>, %10, %cst_7 [2] : vector<2x16x256xf32> to vector<2x16xf32>
    %12 = vector.shape_cast %11 : vector<2x16xf32> to vector<2x16x1xf32>
    %cst_8 = arith.constant dense<0.000000e+00> : vector<16x1xf32>
    %13 = vector.multi_reduction <add>, %12, %cst_8 [0] : vector<2x16x1xf32> to vector<16x1xf32>
    %14 = vector.shape_cast %13 : vector<16x1xf32> to vector<1x16x1xf32>
    %cst_9 = arith.constant 0.001953125 : f32
    %15 = vector.broadcast %cst_9 : f32 to vector<1x16x1xf32>
    %16 = arith.mulf %14, %15 : vector<1x16x1xf32>
    %17 = vector.broadcast %16 : vector<1x16x1xf32> to vector<2x16x256xf32>
    %18 = arith.subf %10, %17 : vector<2x16x256xf32>
    %19 = arith.mulf %18, %18 : vector<2x16x256xf32>
    %cst_10 = arith.constant dense<0.000000e+00> : vector<2x16xf32>
    %20 = vector.multi_reduction <add>, %19, %cst_10 [2] : vector<2x16x256xf32> to vector<2x16xf32>
    %21 = vector.shape_cast %20 : vector<2x16xf32> to vector<2x16x1xf32>
    %cst_11 = arith.constant dense<0.000000e+00> : vector<16x1xf32>
    %22 = vector.multi_reduction <add>, %21, %cst_11 [0] : vector<2x16x1xf32> to vector<16x1xf32>
    %23 = vector.shape_cast %22 : vector<16x1xf32> to vector<1x16x1xf32>
    %cst_12 = arith.constant 0.001953125 : f32
    %24 = vector.broadcast %cst_12 : f32 to vector<1x16x1xf32>
    %25 = arith.mulf %23, %24 : vector<1x16x1xf32>
    %cst_13 = arith.constant 9.99999974E-6 : f32
    %26 = vector.broadcast %cst_13 : f32 to vector<1x16x1xf32>
    %27 = arith.addf %25, %26 : vector<1x16x1xf32>
    %28 = math.rsqrt %27 : vector<1x16x1xf32>
    %c0_14 = arith.constant 0 : index
    %c0_15 = arith.constant 0 : index
    %c0_16 = arith.constant 0 : index
    %29 = vector.load %arg4[%c0_14, %c0_15, %c0_16] : memref<2x16x1xf32, #tpu.memory_space<vmem>>, vector<1x16x1xf32>
    %30 = vector.shape_cast %29 : vector<1x16x1xf32> to vector<16x1xf32>
    %31 = vector.shape_cast %30 : vector<16x1xf32> to vector<1x16x1xf32>
    %32 = arith.mulf %28, %31 : vector<1x16x1xf32>
    %33 = vector.broadcast %32 : vector<1x16x1xf32> to vector<2x16x256xf32>
    %34 = arith.mulf %18, %33 : vector<2x16x256xf32>
    %c0_17 = arith.constant 0 : index
    %c0_18 = arith.constant 0 : index
    %c0_19 = arith.constant 0 : index
    %35 = vector.load %arg5[%c0_17, %c0_18, %c0_19] : memref<2x16x1xf32, #tpu.memory_space<vmem>>, vector<1x16x1xf32>
    %36 = vector.shape_cast %35 : vector<1x16x1xf32> to vector<16x1xf32>
    %37 = vector.shape_cast %36 : vector<16x1xf32> to vector<1x16x1xf32>
    %38 = vector.broadcast %37 : vector<1x16x1xf32> to vector<2x16x256xf32>
    %39 = arith.addf %34, %38 : vector<2x16x256xf32>
    %40 = vector.extract_strided_slice %39 {offsets = [0, 0, 128], sizes = [2, 16, 128], strides = [1, 1, 1]} : vector<2x16x256xf32> to vector<2x16x128xf32>
    %cst_20 = arith.constant 5.000000e-01 : f32
    %41 = vector.broadcast %cst_20 : f32 to vector<2x16x128xf32>
    %42 = arith.mulf %41, %40 : vector<2x16x128xf32>
    %43 = math.tanh %42 : vector<2x16x128xf32>
    %cst_21 = arith.constant 1.000000e+00 : f32
    %44 = vector.broadcast %cst_21 : f32 to vector<2x16x128xf32>
    %45 = arith.addf %43, %44 : vector<2x16x128xf32>
    %cst_22 = arith.constant 5.000000e-01 : f32
    %46 = vector.broadcast %cst_22 : f32 to vector<2x16x128xf32>
    %47 = arith.mulf %46, %45 : vector<2x16x128xf32>
    %48 = vector.extract_strided_slice %39 {offsets = [0, 0, 0], sizes = [2, 16, 128], strides = [1, 1, 1]} : vector<2x16x256xf32> to vector<2x16x128xf32>
    %49 = arith.mulf %48, %47 : vector<2x16x128xf32>
    %50 = arith.addf %49, %0 : vector<2x16x128xf32>
    %cst_23 = arith.constant 0.707106769 : f32
    %51 = vector.broadcast %cst_23 : f32 to vector<2x16x128xf32>
    %52 = arith.mulf %50, %51 : vector<2x16x128xf32>
    %53 = vector.shape_cast %52 : vector<2x16x128xf32> to vector<32x128xf32>
    %c1 = arith.constant 1 : index
    %c0_24 = arith.constant 0 : index
    %c0_25 = arith.constant 0 : index
    %54 = vector.load %arg2[%c1, %c0_24, %c0_25] : memref<2x128x256xf32, #tpu.memory_space<vmem>>, vector<1x128x256xf32>
    %55 = vector.shape_cast %54 : vector<1x128x256xf32> to vector<128x256xf32>
    %cst_26 = arith.constant dense<0.000000e+00> : vector<32x256xf32>
    %56 = tpu.matmul %53, %55, %cst_26 {dimension_numbers = #tpu.dot_dimension_numbers<[1], [0], [0], [1], [0, 0, 1, 1], [], []>} : vector<32x128xf32>, vector<128x256xf32>, vector<32x256xf32> -> vector<32x256xf32>
    %c1_27 = arith.constant 1 : index
    %c0_28 = arith.constant 0 : index
    %57 = vector.load %arg3[%c1_27, %c0_28] : memref<2x256xf32, #tpu.memory_space<vmem>>, vector<1x256xf32>
    %58 = vector.shape_cast %57 : vector<1x256xf32> to vector<256xf32>
    %59 = vector.shape_cast %58 : vector<256xf32> to vector<1x256xf32>
    %60 = vector.broadcast %59 : vector<1x256xf32> to vector<32x256xf32>
    %61 = arith.addf %56, %60 : vector<32x256xf32>
    %62 = vector.shape_cast %61 : vector<32x256xf32> to vector<2x16x256xf32>
    %cst_29 = arith.constant dense<0.000000e+00> : vector<2x16xf32>
    %63 = vector.multi_reduction <add>, %62, %cst_29 [2] : vector<2x16x256xf32> to vector<2x16xf32>
    %64 = vector.shape_cast %63 : vector<2x16xf32> to vector<2x16x1xf32>
    %cst_30 = arith.constant dense<0.000000e+00> : vector<16x1xf32>
    %65 = vector.multi_reduction <add>, %64, %cst_30 [0] : vector<2x16x1xf32> to vector<16x1xf32>
    %66 = vector.shape_cast %65 : vector<16x1xf32> to vector<1x16x1xf32>
    %cst_31 = arith.constant 0.001953125 : f32
    %67 = vector.broadcast %cst_31 : f32 to vector<1x16x1xf32>
    %68 = arith.mulf %66, %67 : vector<1x16x1xf32>
    %69 = vector.broadcast %68 : vector<1x16x1xf32> to vector<2x16x256xf32>
    %70 = arith.subf %62, %69 : vector<2x16x256xf32>
    %71 = arith.mulf %70, %70 : vector<2x16x256xf32>
    %cst_32 = arith.constant dense<0.000000e+00> : vector<2x16xf32>
    %72 = vector.multi_reduction <add>, %71, %cst_32 [2] : vector<2x16x256xf32> to vector<2x16xf32>
    %73 = vector.shape_cast %72 : vector<2x16xf32> to vector<2x16x1xf32>
    %cst_33 = arith.constant dense<0.000000e+00> : vector<16x1xf32>
    %74 = vector.multi_reduction <add>, %73, %cst_33 [0] : vector<2x16x1xf32> to vector<16x1xf32>
    %75 = vector.shape_cast %74 : vector<16x1xf32> to vector<1x16x1xf32>
    %cst_34 = arith.constant 0.001953125 : f32
    %76 = vector.broadcast %cst_34 : f32 to vector<1x16x1xf32>
    %77 = arith.mulf %75, %76 : vector<1x16x1xf32>
    %cst_35 = arith.constant 9.99999974E-6 : f32
    %78 = vector.broadcast %cst_35 : f32 to vector<1x16x1xf32>
    %79 = arith.addf %77, %78 : vector<1x16x1xf32>
    %80 = math.rsqrt %79 : vector<1x16x1xf32>
    %c1_36 = arith.constant 1 : index
    %c0_37 = arith.constant 0 : index
    %c0_38 = arith.constant 0 : index
    %81 = vector.load %arg4[%c1_36, %c0_37, %c0_38] : memref<2x16x1xf32, #tpu.memory_space<vmem>>, vector<1x16x1xf32>
    %82 = vector.shape_cast %81 : vector<1x16x1xf32> to vector<16x1xf32>
    %83 = vector.shape_cast %82 : vector<16x1xf32> to vector<1x16x1xf32>
    %84 = arith.mulf %80, %83 : vector<1x16x1xf32>
    %85 = vector.broadcast %84 : vector<1x16x1xf32> to vector<2x16x256xf32>
    %86 = arith.mulf %70, %85 : vector<2x16x256xf32>
    %c1_39 = arith.constant 1 : index
    %c0_40 = arith.constant 0 : index
    %c0_41 = arith.constant 0 : index
    %87 = vector.load %arg5[%c1_39, %c0_40, %c0_41] : memref<2x16x1xf32, #tpu.memory_space<vmem>>, vector<1x16x1xf32>
    %88 = vector.shape_cast %87 : vector<1x16x1xf32> to vector<16x1xf32>
    %89 = vector.shape_cast %88 : vector<16x1xf32> to vector<1x16x1xf32>
    %90 = vector.broadcast %89 : vector<1x16x1xf32> to vector<2x16x256xf32>
    %91 = arith.addf %86, %90 : vector<2x16x256xf32>
    %92 = vector.extract_strided_slice %91 {offsets = [0, 0, 128], sizes = [2, 16, 128], strides = [1, 1, 1]} : vector<2x16x256xf32> to vector<2x16x128xf32>
    %cst_42 = arith.constant 5.000000e-01 : f32
    %93 = vector.broadcast %cst_42 : f32 to vector<2x16x128xf32>
    %94 = arith.mulf %93, %92 : vector<2x16x128xf32>
    %95 = math.tanh %94 : vector<2x16x128xf32>
    %cst_43 = arith.constant 1.000000e+00 : f32
    %96 = vector.broadcast %cst_43 : f32 to vector<2x16x128xf32>
    %97 = arith.addf %95, %96 : vector<2x16x128xf32>
    %cst_44 = arith.constant 5.000000e-01 : f32
    %98 = vector.broadcast %cst_44 : f32 to vector<2x16x128xf32>
    %99 = arith.mulf %98, %97 : vector<2x16x128xf32>
    %100 = vector.extract_strided_slice %91 {offsets = [0, 0, 0], sizes = [2, 16, 128], strides = [1, 1, 1]} : vector<2x16x256xf32> to vector<2x16x128xf32>
    %101 = arith.mulf %100, %99 : vector<2x16x128xf32>
    %102 = arith.addf %101, %52 : vector<2x16x128xf32>
    %cst_45 = arith.constant 0.707106769 : f32
    %103 = vector.broadcast %cst_45 : f32 to vector<2x16x128xf32>
    %104 = arith.mulf %102, %103 : vector<2x16x128xf32>
    %c0_46 = arith.constant 0 : index
    %c0_47 = arith.constant 0 : index
    %c0_48 = arith.constant 0 : index
    %105 = vector.load %arg6[%c0_46, %c0_47, %c0_48] : memref<2x16x128xf32, #tpu.memory_space<vmem>>, vector<2x16x128xf32>
    tpu.vector_store %arg6[%c0_46, %c0_47, %c0_48], %104 {strides = array<i32>} : memref<2x16x128xf32, #tpu.memory_space<vmem>>, vector<2x16x128xf32>,
    return
  }
  func.func @transform_0(%arg0: i32) -> (i32, i32, i32) {
    %c0_i32 = arith.constant 0 : i32
    %c0_i32_0 = arith.constant 0 : i32
    %c0_i32_1 = arith.constant 0 : i32
    return %c0_i32, %arg0, %c0_i32_0 : i32, i32, i32
  }
  func.func @transform_1(%arg0: i32) -> (i32, i32, i32) {
    %c0_i32 = arith.constant 0 : i32
    %c0_i32_0 = arith.constant 0 : i32
    %c0_i32_1 = arith.constant 0 : i32
    %c0_i32_2 = arith.constant 0 : i32
    return %c0_i32, %c0_i32_0, %c0_i32_1 : i32, i32, i32
  }
  func.func @transform_2(%arg0: i32) -> (i32, i32) {
    %c0_i32 = arith.constant 0 : i32
    %c0_i32_0 = arith.constant 0 : i32
    %c0_i32_1 = arith.constant 0 : i32
    return %c0_i32, %c0_i32_0 : i32, i32
  }
  func.func @transform_3(%arg0: i32) -> (i32, i32, i32) {
    %c0_i32 = arith.constant 0 : i32
    %c0_i32_0 = arith.constant 0 : i32
    %c0_i32_1 = arith.constant 0 : i32
    return %c0_i32, %arg0, %c0_i32_0 : i32, i32, i32
  }
  func.func @transform_4(%arg0: i32) -> (i32, i32, i32) {
    %c0_i32 = arith.constant 0 : i32
    %c0_i32_0 = arith.constant 0 : i32
    %c0_i32_1 = arith.constant 0 : i32
    return %c0_i32, %arg0, %c0_i32_0 : i32, i32, i32
  }
  func.func @transform_5(%arg0: i32) -> (i32, i32, i32) {
    %c0_i32 = arith.constant 0 : i32
    %c0_i32_0 = arith.constant 0 : i32
    %c0_i32_1 = arith.constant 0 : i32
    return %c0_i32, %arg0, %c0_i32_0 : i32, i32, i32
  }
}

</mosaic_0001>

<llo_original>
// kernel: tile.14
$region0: #{tile.14}
  %s0 = inlined_call_operand.vmem [shape: f32[2,8,16], index: 0, kind: input, shape index: {}]
  %s1 = inlined_call_operand.vmem [shape: f32[2,128], index: 1, kind: output, shape index: {}]
  $region1: #{tile.14} parent=0
    #allocation0 [shape = 'u8[4096]{0}', space=vmem, size = 0x1000, scoped, tag = 'scoped mem for output reshape']
    %s2 = smov 3
    %v3 = vld [vmem:[%s0] ss:$8 sm:%s2]
    %vm4 = vcmask 130048
    %5 = vst.msk [vmem:[#allocation0] sm:$0x3] %vm4, %v3
    %s6 = scalar_lea.vmem %s0, 7
    %s7 = smov 3
    %v8 = vld [vmem:[%s6] ss:$8 sm:%s7]
    %9 = vrot.lane.b32.xlu0 %v8, 112
    %v10 = vpop.permute.xlu0 %9
    %vm11 = vcmask 1048448
    %12 = vst.msk [vmem:[#allocation0] sm:$0x3] %vm11, %v10
    %s13 = scalar_lea.vmem %s0, 6
    %s14 = smov 3
    %v15 = vld [vmem:[%s13] ss:$8 sm:%s14]
    %16 = vrot.lane.b32.xlu0 %v15, 96
    %v17 = vpop.permute.xlu0 %16
    %vm18 = vcmask 917248
    %19 = vst.msk [vmem:[#allocation0] sm:$0x3] %vm18, %v17
    %s20 = scalar_lea.vmem %s0, 5
    %s21 = smov 3
    %v22 = vld [vmem:[%s20] ss:$8 sm:%s21]
    %23 = vrot.lane.b32.xlu0 %v22, 80
    %v24 = vpop.permute.xlu0 %23
    %vm25 = vcmask 786048
    %26 = vst.msk [vmem:[#allocation0] sm:$0x3] %vm25, %v24
    %s27 = scalar_lea.vmem %s0, 4
    %s28 = smov 3
    %v29 = vld [vmem:[%s27] ss:$8 sm:%s28]
    %30 = vrot.lane.b32.xlu0 %v29, 64
    %v31 = vpop.permute.xlu0 %30
    %vm32 = vcmask 654848
    %33 = vst.msk [vmem:[#allocation0] sm:$0x3] %vm32, %v31
    %s34 = scalar_lea.vmem %s0, 3
    %s35 = smov 3
    %v36 = vld [vmem:[%s34] ss:$8 sm:%s35]
    %37 = vrot.lane.b32.xlu0 %v36, 48
    %v38 = vpop.permute.xlu0 %37
    %vm39 = vcmask 523648
    %40 = vst.msk [vmem:[#allocation0] sm:$0x3] %vm39, %v38
    %s41 = scalar_lea.vmem %s0, 2
    %s42 = smov 3
    %v43 = vld [vmem:[%s41] ss:$8 sm:%s42]
    %44 = vrot.lane.b32.xlu0 %v43, 32
    %v45 = vpop.permute.xlu0 %44
    %vm46 = vcmask 392448
    %47 = vst.msk [vmem:[#allocation0] sm:$0x3] %vm46, %v45
    %s48 = scalar_lea.vmem %s0, 1
    %s49 = smov 3
    %v50 = vld [vmem:[%s48] ss:$8 sm:%s49]
    %51 = vrot.lane.b32.xlu0 %v50, 16
    %v52 = vpop.permute.xlu0 %51
    %vm53 = vcmask 261248
    %54 = vst.msk [vmem:[#allocation0] sm:$0x3] %vm53, %v52
    %s56 = sshllo.u32 0, 2
    %v58 = vld [vmem:[#allocation0] sm:%s56]
    %s59 = sshllo.u32 0, 2
    %60 = vst [vmem:[%s1] sm:%s59] %v58

// kernel: feature_transformer.1
$region0: #{feature_transformer.1}
  #allocation0 [shape = 'u32[]', space=smem, size = 0x4, offset = 0x4, fixed_abs, tag = 'smem constant byte address 0x4 - core index']
  #allocation1 [shape = 'u32[144,128]{1,0:T(1,128)}', space=vmem, size = 0x12000, scoped, tag = 'internal scratch']
  %s0 = inlined_call_operand.vmem [shape: f32[2,16,128], index: 0, kind: input, shape index: {}]
  %s1 = inlined_call_operand.vmem [shape: f32[2,128,256], index: 1, kind: input, shape index: {}]
  %s2 = inlined_call_operand.vmem [shape: f32[2,256], index: 2, kind: input, shape index: {}]
  %s3 = inlined_call_operand.vmem [shape: f32[2,16,1], index: 3, kind: input, shape index: {}]
  %s4 = inlined_call_operand.vmem [shape: f32[2,16,1], index: 4, kind: input, shape index: {}]
  %s5 = inlined_call_operand.vmem [shape: f32[2,16,128], index: 5, kind: output, shape index: {}]
  %s6 = sld [smem:[#allocation0]]
  $region30: #{feature_transformer.1} parent=0
    _
  %s8 = ssub.s32 1, %s6
  %s9 = scalar_select 0, %s8, %s6
  // Predicated region
  $region2: #{feature_transformer.1} parent=0 // pred_check
    _
  $region3: #{feature_transformer.1} parent=0 // pred_check_branch
    %11 = sbr.rel (0) target = $region5
  $region4: #{feature_transformer.1} parent=0 // pred_region
    _
  $region5: #{feature_transformer.1} parent=0 // pred_fallthru
    _
  // Predicated region
  $region6: #{feature_transformer.1} parent=0 // pred_check
    _
  $region7: #{feature_transformer.1} parent=0 // pred_check_branch
    %13 = sbr.rel (0) target = $region9
  $region8: #{feature_transformer.1} parent=0 // pred_region
    _
  $region9: #{feature_transformer.1} parent=0 // pred_fallthru
    _
  // Predicated region
  $region10: #{feature_transformer.1} parent=0 // pred_check
    _
  $region11: #{feature_transformer.1} parent=0 // pred_check_branch
    %15 = sbr.rel (0) target = $region13
  $region12: #{feature_transformer.1} parent=0 // pred_region
    _
  $region13: #{feature_transformer.1} parent=0 // pred_fallthru
    _
  // Predicated region
  $region14: #{feature_transformer.1} parent=0 // pred_check
    _
  $region15: #{feature_transformer.1} parent=0 // pred_check_branch
    %17 = sbr.rel (0) target = $region17
  $region16: #{feature_transformer.1} parent=0 // pred_region
    _
  $region17: #{feature_transformer.1} parent=0 // pred_fallthru
    _
  // Predicated region
  $region18: #{feature_transformer.1} parent=0 // pred_check
    _
  $region19: #{feature_transformer.1} parent=0 // pred_check_branch
    %19 = sbr.rel (0) target = $region21
  $region20: #{feature_transformer.1} parent=0 // pred_region
    _
  $region21: #{feature_transformer.1} parent=0 // pred_fallthru
    _
  %v20 = vld [vmem:[%s0] sm:$0xff]
  %v21 = vld [vmem:[%s0 + $0x8] sm:$0xff]
  %v22 = vld [vmem:[%s0 + $0x10] sm:$0xff]
  %v23 = vld [vmem:[%s0 + $0x18] sm:$0xff]
  %v24 = vld [vmem:[%s1] sm:$0xff]
  %v25 = vld [vmem:[%s1 + $0x8] sm:$0xff]
  %v26 = vld [vmem:[%s1 + $0x10] sm:$0xff]
  %v27 = vld [vmem:[%s1 + $0x18] sm:$0xff]
  %v28 = vld [vmem:[%s1 + $0x20] sm:$0xff]
  %v29 = vld [vmem:[%s1 + $0x28] sm:$0xff]
  %v30 = vld [vmem:[%s1 + $0x30] sm:$0xff]
  %v31 = vld [vmem:[%s1 + $0x38] sm:$0xff]
  %v32 = vld [vmem:[%s1 + $0x40] sm:$0xff]
  %v33 = vld [vmem:[%s1 + $0x48] sm:$0xff]
  %v34 = vld [vmem:[%s1 + $0x50] sm:$0xff]
  %v35 = vld [vmem:[%s1 + $0x58] sm:$0xff]
  %v36 = vld [vmem:[%s1 + $0x60] sm:$0xff]
  %v37 = vld [vmem:[%s1 + $0x68] sm:$0xff]
  %v38 = vld [vmem:[%s1 + $0x70] sm:$0xff]
  %v39 = vld [vmem:[%s1 + $0x78] sm:$0xff]
  %v40 = vld [vmem:[%s1 + $0x80] sm:$0xff]
  %v41 = vld [vmem:[%s1 + $0x88] sm:$0xff]
  %v42 = vld [vmem:[%s1 + $0x90] sm:$0xff]
  %v43 = vld [vmem:[%s1 + $0x98] sm:$0xff]
  %v44 = vld [vmem:[%s1 + $0xa0] sm:$0xff]
  %v45 = vld [vmem:[%s1 + $0xa8] sm:$0xff]
  %v46 = vld [vmem:[%s1 + $0xb0] sm:$0xff]
  %v47 = vld [vmem:[%s1 + $0xb8] sm:$0xff]
  %v48 = vld [vmem:[%s1 + $0xc0] sm:$0xff]
  %v49 = vld [vmem:[%s1 + $0xc8] sm:$0xff]
  %v50 = vld [vmem:[%s1 + $0xd0] sm:$0xff]
  %v51 = vld [vmem:[%s1 + $0xd8] sm:$0xff]
  %v52 = vld [vmem:[%s1 + $0xe0] sm:$0xff]
  %v53 = vld [vmem:[%s1 + $0xe8] sm:$0xff]
  %v54 = vld [vmem:[%s1 + $0xf0] sm:$0xff]
  %v55 = vld [vmem:[%s1 + $0xf8] sm:$0xff]
  %v56 = vld [vmem:[%s2] ss:$2 sm:$0x3]
  %v58 = vlaneseq
  %v59 = vshrl.u32 %v58, 7
  %v60 = vsub.s32 0, %v59
  %v61 = vrot.slane %v56, %v60
  %v62 = vlaneseq
  %v63 = vshrl.u32 %v62, 7
  %v64 = vsub.s32 1, %v63
  %v65 = vrot.slane %v56, %v64
  %68 = vmatprep.subr.mxu0 %v25
  %69 = vmatpush1.msra.mxu0 %v24
  %70 = vmatprep.subr.mxu0 %v27
  %71 = vmatpush1.msra.mxu0 %v26
  %72 = vmatprep.subr.mxu0 %v29
  %73 = vmatpush1.msra.mxu0 %v28
  %74 = vmatprep.subr.mxu0 %v31
  %75 = vmatpush1.msra.mxu0 %v30
  %76 = vmatprep.subr.mxu0 %v33
  %77 = vmatpush1.msra.mxu0 %v32
  %78 = vmatprep.subr.mxu0 %v35
  %79 = vmatpush1.msra.mxu0 %v34
  %80 = vmatprep.subr.mxu0 %v37
  %81 = vmatpush1.msra.mxu0 %v36
  %82 = vmatprep.subr.mxu0 %v39
  %83 = vmatpush1.msra.mxu0 %v38
  %84 = vmatprep.subr.mxu0 %v41
  %85 = vmatpush1.msra.mxu0 %v40
  %86 = vmatprep.subr.mxu0 %v43
  %87 = vmatpush1.msra.mxu0 %v42
  %88 = vmatprep.subr.mxu0 %v45
  %89 = vmatpush1.msra.mxu0 %v44
  %90 = vmatprep.subr.mxu0 %v47
  %91 = vmatpush1.msra.mxu0 %v46
  %92 = vmatprep.subr.mxu0 %v49
  %93 = vmatpush1.msra.mxu0 %v48
  %94 = vmatprep.subr.mxu0 %v51
  %95 = vmatpush1.msra.mxu0 %v50
  %96 = vmatprep.subr.mxu0 %v53
  %97 = vmatpush1.msra.mxu0 %v52
  %98 = vmatprep.subr.mxu0 %v55
  %99 = vmatpush1.msra.mxu0 %v54
  %100 = vmatprep.subr.mxu0 0.0
  %101 = vmatpush1.msra.mxu0 0.0
  %102 = vmatprep.subr.mxu0 0.0
  %103 = vmatpush1.msra.mxu0 0.0
  %104 = vmatprep.subr.mxu0 0.0
  %105 = vmatpush1.msra.mxu0 0.0
  %106 = vmatprep.subr.mxu0 0.0
  %107 = vmatpush1.msra.mxu0 0.0
  %108 = vmatprep.subr.mxu0 0.0
  %109 = vmatpush1.msra.mxu0 0.0
  %110 = vmatprep.subr.mxu0 0.0
  %111 = vmatpush1.msra.mxu0 0.0
  %112 = vmatprep.subr.mxu0 0.0
  %113 = vmatpush1.msra.mxu0 0.0
  %114 = vmatprep.subr.mxu0 0.0
  %115 = vmatpush1.msra.mxu0 0.0
  %116 = vmatprep.subr.mxu0 0.0
  %117 = vmatpush1.msra.mxu0 0.0
  %118 = vmatprep.subr.mxu0 0.0
  %119 = vmatpush1.msra.mxu0 0.0
  %120 = vmatprep.subr.mxu0 0.0
  %121 = vmatpush1.msra.mxu0 0.0
  %122 = vmatprep.subr.mxu0 0.0
  %123 = vmatpush1.msra.mxu0 0.0
  %124 = vmatprep.subr.mxu0 0.0
  %125 = vmatpush1.msra.mxu0 0.0
  %126 = vmatprep.subr.mxu0 0.0
  %127 = vmatpush1.msra.mxu0 0.0
  %128 = vmatprep.subr.mxu0 0.0
  %129 = vmatpush1.msra.mxu0 0.0
  %130 = vmatprep.subr.mxu0 0.0
  %131 = vmatpush1.msra.mxu0 0.0
  %132 = vmatprep.mubr.f32.mxu0 0.0
  %133 = vmatmul.mubr.f32.gmra.mrb[0].mxu0 %v20
  %v134 = vpop.f32.mrb[0].mxu0
  %v135 = vadd.f32 %v61, %v134
  %v136 = vpop.f32.mrb[0].mxu0
  %v137 = vadd.f32 %v65, %v136
  %138 = vmatprep.mubr.f32.mxu0 0.0
  %139 = vmatmul.mubr.f32.gmra.mrb[0].mxu0 %v21
  %v140 = vpop.f32.mrb[0].mxu0
  %v141 = vadd.f32 %v61, %v140
  %v142 = vpop.f32.mrb[0].mxu0
  %v143 = vadd.f32 %v65, %v142
  %144 = vmatprep.mubr.f32.mxu0 0.0
  %145 = vmatmul.mubr.f32.gmra.mrb[0].mxu0 %v22
  %v146 = vpop.f32.mrb[0].mxu0
  %v147 = vadd.f32 %v61, %v146
  %v148 = vpop.f32.mrb[0].mxu0
  %v149 = vadd.f32 %v65, %v148
  %150 = vmatprep.mubr.f32.mxu0 0.0
  %151 = vmatmul.mubr.f32.gmra.mrb[0].mxu0 %v23
  %v152 = vpop.f32.mrb[0].mxu0
  %v153 = vadd.f32 %v61, %v152
  %v154 = vpop.f32.mrb[0].mxu0
  %v155 = vadd.f32 %v65, %v154
  %156 = vdwg.mxu0
  %v157 = vadd.f32 %v135, %v137
  %158 = vadd.xlane.f32.xlu0 %v157
  %v159 = vpop.xlane.xlu0 %158
  %v160 = vadd.f32 %v141, %v143
  %161 = vadd.xlane.f32.xlu0 %v160
  %v162 = vpop.xlane.xlu0 %161
  %v163 = vadd.f32 %v147, %v149
  %164 = vadd.xlane.f32.xlu0 %v163
  %v165 = vpop.xlane.xlu0 %164
  %v166 = vadd.f32 %v153, %v155
  %167 = vadd.xlane.f32.xlu0 %v166
  %v168 = vpop.xlane.xlu0 %167
  %v169 = vadd.f32 %v159, %v165
  %v170 = vadd.f32 %v162, %v168
  %v171 = vmul.f32 %v169, 0.001953125
  %v172 = vmul.f32 %v170, 0.001953125
  %v173 = vsub.f32 %v135, %v171
  %v174 = vsub.f32 %v137, %v171
  %v175 = vsub.f32 %v141, %v172
  %v176 = vsub.f32 %v143, %v172
  %v177 = vsub.f32 %v147, %v171
  %v178 = vsub.f32 %v149, %v171
  %v179 = vsub.f32 %v153, %v172
  %v180 = vsub.f32 %v155, %v172
  %v181 = vmul.f32 %v173, %v173
  %v182 = vmul.f32 %v174, %v174
  %v183 = vmul.f32 %v175, %v175
  %v184 = vmul.f32 %v176, %v176
  %v185 = vmul.f32 %v177, %v177
  %v186 = vmul.f32 %v178, %v178
  %v187 = vmul.f32 %v179, %v179
  %v188 = vmul.f32 %v180, %v180
  %v189 = vadd.f32 %v181, %v182
  %190 = vadd.xlane.f32.xlu0 %v189
  %v191 = vpop.xlane.xlu0 %190
  %v192 = vadd.f32 %v183, %v184
  %193 = vadd.xlane.f32.xlu0 %v192
  %v194 = vpop.xlane.xlu0 %193
  %v195 = vadd.f32 %v185, %v186
  %196 = vadd.xlane.f32.xlu0 %v195
  %v197 = vpop.xlane.xlu0 %196
  %v198 = vadd.f32 %v187, %v188
  %199 = vadd.xlane.f32.xlu0 %v198
  %v200 = vpop.xlane.xlu0 %199
  %v201 = vadd.f32 %v191, %v197
  %v202 = vadd.f32 %v194, %v200
  %v203 = vmul.f32 %v201, 0.001953125
  %v204 = vmul.f32 %v202, 0.001953125
  %v205 = vadd.f32 %v203, 1e-05
  %v206 = vadd.f32 %v204, 1e-05
  %v207 = vrsqrt.pop %v205
  %v208 = vrsqrt.pop %v206
  %v209 = vld [vmem:[%s3] sm:$0xff]
  %v210 = vld [vmem:[%s3 + $0x8] sm:$0xff]
  %v211 = vmul.f32 %v207, %v209
  %v212 = vmul.f32 %v208, %v210
  %214 = vset.pattern.permute.xlu0 0
  %215 = vperm.xlu0 %214, %v211
  %v216 = vpop.permute.xlu0 %215
  %219 = vset.pattern.permute.xlu0 0
  %220 = vperm.xlu0 %219, %v212
  %v221 = vpop.permute.xlu0 %220
  %v223 = vmul.f32 %v173, %v216
  %v224 = vmul.f32 %v174, %v216
  %v225 = vmul.f32 %v175, %v221
  %v226 = vmul.f32 %v176, %v221
  %v227 = vmul.f32 %v177, %v216
  %v228 = vmul.f32 %v178, %v216
  %v229 = vmul.f32 %v179, %v221
  %v230 = vmul.f32 %v180, %v221
  %v231 = vld [vmem:[%s4] sm:$0xff]
  %v232 = vld [vmem:[%s4 + $0x8] sm:$0xff]
  %234 = vset.pattern.permute.xlu0 0
  %235 = vperm.xlu0 %234, %v231
  %v236 = vpop.permute.xlu0 %235
  %239 = vset.pattern.permute.xlu0 0
  %240 = vperm.xlu0 %239, %v232
  %v241 = vpop.permute.xlu0 %240
  %v243 = vadd.f32 %v223, %v236
  %v244 = vadd.f32 %v224, %v236
  %v245 = vadd.f32 %v225, %v241
  %v246 = vadd.f32 %v226, %v241
  %v247 = vadd.f32 %v227, %v236
  %v248 = vadd.f32 %v228, %v236
  %v249 = vadd.f32 %v229, %v241
  %v250 = vadd.f32 %v230, %v241
  %v251 = vmul.f32 %v244, 0.5
  %v252 = vmul.f32 %v246, 0.5
  %v253 = vmul.f32 %v248, 0.5
  %v254 = vmul.f32 %v250, 0.5
  %v255 = vtanh.pop %v251
  %v256 = vtanh.pop %v252
  %v257 = vtanh.pop %v253
  %v258 = vtanh.pop %v254
  %v259 = vadd.f32 %v255, 1.0
  %v260 = vadd.f32 %v256, 1.0
  %v261 = vadd.f32 %v257, 1.0
  %v262 = vadd.f32 %v258, 1.0
  %v263 = vmul.f32 %v259, 0.5
  %v264 = vmul.f32 %v260, 0.5
  %v265 = vmul.f32 %v261, 0.5
  %v266 = vmul.f32 %v262, 0.5
  %v267 = vmul.f32 %v243, %v263
  %v268 = vmul.f32 %v245, %v264
  %v269 = vmul.f32 %v247, %v265
  %v270 = vmul.f32 %v249, %v266
  %v271 = vadd.f32 %v267, %v20
  %v272 = vadd.f32 %v268, %v21
  %v273 = vadd.f32 %v269, %v22
  %v274 = vadd.f32 %v270, %v23
  %v275 = vmul.f32 %v271, 0.70710677
  %v276 = vmul.f32 %v272, 0.70710677
  %v277 = vmul.f32 %v273, 0.70710677
  %v278 = vmul.f32 %v274, 0.70710677
  %s279 = scalar_lea.vmem %s1, 256
  %v280 = vld [vmem:[%s279] sm:$0xff]
  %v281 = vld [vmem:[%s279 + $0x8] sm:$0xff]
  %v282 = vld [vmem:[%s279 + $0x10] sm:$0xff]
  %v283 = vld [vmem:[%s279 + $0x18] sm:$0xff]
  %v284 = vld [vmem:[%s279 + $0x20] sm:$0xff]
  %v285 = vld [vmem:[%s279 + $0x28] sm:$0xff]
  %v286 = vld [vmem:[%s279 + $0x30] sm:$0xff]
  %v287 = vld [vmem:[%s279 + $0x38] sm:$0xff]
  %v288 = vld [vmem:[%s279 + $0x40] sm:$0xff]
  %v289 = vld [vmem:[%s279 + $0x48] sm:$0xff]
  %v290 = vld [vmem:[%s279 + $0x50] sm:$0xff]
  %v291 = vld [vmem:[%s279 + $0x58] sm:$0xff]
  %v292 = vld [vmem:[%s279 + $0x60] sm:$0xff]
  %v293 = vld [vmem:[%s279 + $0x68] sm:$0xff]
  %v294 = vld [vmem:[%s279 + $0x70] sm:$0xff]
  %v295 = vld [vmem:[%s279 + $0x78] sm:$0xff]
  %v296 = vld [vmem:[%s279 + $0x80] sm:$0xff]
  %v297 = vld [vmem:[%s279 + $0x88] sm:$0xff]
  %v298 = vld [vmem:[%s279 + $0x90] sm:$0xff]
  %v299 = vld [vmem:[%s279 + $0x98] sm:$0xff]
  %v300 = vld [vmem:[%s279 + $0xa0] sm:$0xff]
  %v301 = vld [vmem:[%s279 + $0xa8] sm:$0xff]
  %v302 = vld [vmem:[%s279 + $0xb0] sm:$0xff]
  %v303 = vld [vmem:[%s279 + $0xb8] sm:$0xff]
  %v304 = vld [vmem:[%s279 + $0xc0] sm:$0xff]
  %v305 = vld [vmem:[%s279 + $0xc8] sm:$0xff]
  %v306 = vld [vmem:[%s279 + $0xd0] sm:$0xff]
  %v307 = vld [vmem:[%s279 + $0xd8] sm:$0xff]
  %v308 = vld [vmem:[%s279 + $0xe0] sm:$0xff]
  %v309 = vld [vmem:[%s279 + $0xe8] sm:$0xff]
  %v310 = vld [vmem:[%s279 + $0xf0] sm:$0xff]
  %v311 = vld [vmem:[%s279 + $0xf8] sm:$0xff]
  %s312 = scalar_lea.vmem %s2, 1
  %v313 = vld [vmem:[%s312] ss:$2 sm:$0x3]
  %v315 = vlaneseq
  %v316 = vshrl.u32 %v315, 7
  %v317 = vsub.s32 0, %v316
  %v318 = vrot.slane %v313, %v317
  %v319 = vlaneseq
  %v320 = vshrl.u32 %v319, 7
  %v321 = vsub.s32 1, %v320
  %v322 = vrot.slane %v313, %v321
  %325 = vmatprep.subr.mxu0 %v281
  %326 = vmatpush1.msra.mxu0 %v280
  %327 = vmatprep.subr.mxu0 %v283
  %328 = vmatpush1.msra.mxu0 %v282
  %329 = vmatprep.subr.mxu0 %v285
  %330 = vmatpush1.msra.mxu0 %v284
  %331 = vmatprep.subr.mxu0 %v287
  %332 = vmatpush1.msra.mxu0 %v286
  %333 = vmatprep.subr.mxu0 %v289
  %334 = vmatpush1.msra.mxu0 %v288
  %335 = vmatprep.subr.mxu0 %v291
  %336 = vmatpush1.msra.mxu0 %v290
  %337 = vmatprep.subr.mxu0 %v293
  %338 = vmatpush1.msra.mxu0 %v292
  %339 = vmatprep.subr.mxu0 %v295
  %340 = vmatpush1.msra.mxu0 %v294
  %341 = vmatprep.subr.mxu0 %v297
  %342 = vmatpush1.msra.mxu0 %v296
  %343 = vmatprep.subr.mxu0 %v299
  %344 = vmatpush1.msra.mxu0 %v298
  %345 = vmatprep.subr.mxu0 %v301
  %346 = vmatpush1.msra.mxu0 %v300
  %347 = vmatprep.subr.mxu0 %v303
  %348 = vmatpush1.msra.mxu0 %v302
  %349 = vmatprep.subr.mxu0 %v305
  %350 = vmatpush1.msra.mxu0 %v304
  %351 = vmatprep.subr.mxu0 %v307
  %352 = vmatpush1.msra.mxu0 %v306
  %353 = vmatprep.subr.mxu0 %v309
  %354 = vmatpush1.msra.mxu0 %v308
  %355 = vmatprep.subr.mxu0 %v311
  %356 = vmatpush1.msra.mxu0 %v310
  %357 = vmatprep.subr.mxu0 0.0
  %358 = vmatpush1.msra.mxu0 0.0
  %359 = vmatprep.subr.mxu0 0.0
  %360 = vmatpush1.msra.mxu0 0.0
  %361 = vmatprep.subr.mxu0 0.0
  %362 = vmatpush1.msra.mxu0 0.0
  %363 = vmatprep.subr.mxu0 0.0
  %364 = vmatpush1.msra.mxu0 0.0
  %365 = vmatprep.subr.mxu0 0.0
  %366 = vmatpush1.msra.mxu0 0.0
  %367 = vmatprep.subr.mxu0 0.0
  %368 = vmatpush1.msra.mxu0 0.0
  %369 = vmatprep.subr.mxu0 0.0
  %370 = vmatpush1.msra.mxu0 0.0
  %371 = vmatprep.subr.mxu0 0.0
  %372 = vmatpush1.msra.mxu0 0.0
  %373 = vmatprep.subr.mxu0 0.0
  %374 = vmatpush1.msra.mxu0 0.0
  %375 = vmatprep.subr.mxu0 0.0
  %376 = vmatpush1.msra.mxu0 0.0
  %377 = vmatprep.subr.mxu0 0.0
  %378 = vmatpush1.msra.mxu0 0.0
  %379 = vmatprep.subr.mxu0 0.0
  %380 = vmatpush1.msra.mxu0 0.0
  %381 = vmatprep.subr.mxu0 0.0
  %382 = vmatpush1.msra.mxu0 0.0
  %383 = vmatprep.subr.mxu0 0.0
  %384 = vmatpush1.msra.mxu0 0.0
  %385 = vmatprep.subr.mxu0 0.0
  %386 = vmatpush1.msra.mxu0 0.0
  %387 = vmatprep.subr.mxu0 0.0
  %388 = vmatpush1.msra.mxu0 0.0
  %389 = vmatprep.mubr.f32.mxu0 0.0
  %390 = vmatmul.mubr.f32.gmra.mrb[0].mxu0 %v275
  %v391 = vpop.f32.mrb[0].mxu0
  %v392 = vadd.f32 %v318, %v391
  %v393 = vpop.f32.mrb[0].mxu0
  %v394 = vadd.f32 %v322, %v393
  %395 = vmatprep.mubr.f32.mxu0 0.0
  %396 = vmatmul.mubr.f32.gmra.mrb[0].mxu0 %v276
  %v397 = vpop.f32.mrb[0].mxu0
  %v398 = vadd.f32 %v318, %v397
  %v399 = vpop.f32.mrb[0].mxu0
  %v400 = vadd.f32 %v322, %v399
  %401 = vmatprep.mubr.f32.mxu0 0.0
  %402 = vmatmul.mubr.f32.gmra.mrb[0].mxu0 %v277
  %v403 = vpop.f32.mrb[0].mxu0
  %v404 = vadd.f32 %v318, %v403
  %v405 = vpop.f32.mrb[0].mxu0
  %v406 = vadd.f32 %v322, %v405
  %407 = vmatprep.mubr.f32.mxu0 0.0
  %408 = vmatmul.mubr.f32.gmra.mrb[0].mxu0 %v278
  %v409 = vpop.f32.mrb[0].mxu0
  %v410 = vadd.f32 %v318, %v409
  %v411 = vpop.f32.mrb[0].mxu0
  %v412 = vadd.f32 %v322, %v411
  %413 = vdwg.mxu0
  %v414 = vadd.f32 %v392, %v394
  %415 = vadd.xlane.f32.xlu0 %v414
  %v416 = vpop.xlane.xlu0 %415
  %v417 = vadd.f32 %v398, %v400
  %418 = vadd.xlane.f32.xlu0 %v417
  %v419 = vpop.xlane.xlu0 %418
  %v420 = vadd.f32 %v404, %v406
  %421 = vadd.xlane.f32.xlu0 %v420
  %v422 = vpop.xlane.xlu0 %421
  %v423 = vadd.f32 %v410, %v412
  %424 = vadd.xlane.f32.xlu0 %v423
  %v425 = vpop.xlane.xlu0 %424
  %v426 = vadd.f32 %v416, %v422
  %v427 = vadd.f32 %v419, %v425
  %v428 = vmul.f32 %v426, 0.001953125
  %v429 = vmul.f32 %v427, 0.001953125
  %v430 = vsub.f32 %v392, %v428
  %v431 = vsub.f32 %v394, %v428
  %v432 = vsub.f32 %v398, %v429
  %v433 = vsub.f32 %v400, %v429
  %v434 = vsub.f32 %v404, %v428
  %v435 = vsub.f32 %v406, %v428
  %v436 = vsub.f32 %v410, %v429
  %v437 = vsub.f32 %v412, %v429
  %v438 = vmul.f32 %v430, %v430
  %v439 = vmul.f32 %v431, %v431
  %v440 = vmul.f32 %v432, %v432
  %v441 = vmul.f32 %v433, %v433
  %v442 = vmul.f32 %v434, %v434
  %v443 = vmul.f32 %v435, %v435
  %v444 = vmul.f32 %v436, %v436
  %v445 = vmul.f32 %v437, %v437
  %v446 = vadd.f32 %v438, %v439
  %447 = vadd.xlane.f32.xlu0 %v446
  %v448 = vpop.xlane.xlu0 %447
  %v449 = vadd.f32 %v440, %v441
  %450 = vadd.xlane.f32.xlu0 %v449
  %v451 = vpop.xlane.xlu0 %450
  %v452 = vadd.f32 %v442, %v443
  %453 = vadd.xlane.f32.xlu0 %v452
  %v454 = vpop.xlane.xlu0 %453
  %v455 = vadd.f32 %v444, %v445
  %456 = vadd.xlane.f32.xlu0 %v455
  %v457 = vpop.xlane.xlu0 %456
  %v458 = vadd.f32 %v448, %v454
  %v459 = vadd.f32 %v451, %v457
  %v460 = vmul.f32 %v458, 0.001953125
  %v461 = vmul.f32 %v459, 0.001953125
  %v462 = vadd.f32 %v460, 1e-05
  %v463 = vadd.f32 %v461, 1e-05
  %v464 = vrsqrt.pop %v462
  %v465 = vrsqrt.pop %v463
  %s466 = scalar_lea.vmem %s3, 16
  %v467 = vld [vmem:[%s466] sm:$0xff]
  %v468 = vld [vmem:[%s466 + $0x8] sm:$0xff]
  %v469 = vmul.f32 %v464, %v467
  %v470 = vmul.f32 %v465, %v468
  %472 = vset.pattern.permute.xlu0 0
  %473 = vperm.xlu0 %472, %v469
  %v474 = vpop.permute.xlu0 %473
  %477 = vset.pattern.permute.xlu0 0
  %478 = vperm.xlu0 %477, %v470
  %v479 = vpop.permute.xlu0 %478
  %v481 = vmul.f32 %v430, %v474
  %v482 = vmul.f32 %v431, %v474
  %v483 = vmul.f32 %v432, %v479
  %v484 = vmul.f32 %v433, %v479
  %v485 = vmul.f32 %v434, %v474
  %v486 = vmul.f32 %v435, %v474
  %v487 = vmul.f32 %v436, %v479
  %v488 = vmul.f32 %v437, %v479
  %s489 = scalar_lea.vmem %s4, 16
  %v490 = vld [vmem:[%s489] sm:$0xff]
  %v491 = vld [vmem:[%s489 + $0x8] sm:$0xff]
  %493 = vset.pattern.permute.xlu0 0
  %494 = vperm.xlu0 %493, %v490
  %v495 = vpop.permute.xlu0 %494
  %498 = vset.pattern.permute.xlu0 0
  %499 = vperm.xlu0 %498, %v491
  %v500 = vpop.permute.xlu0 %499
  %v502 = vadd.f32 %v481, %v495
  %v503 = vadd.f32 %v482, %v495
  %v504 = vadd.f32 %v483, %v500
  %v505 = vadd.f32 %v484, %v500
  %v506 = vadd.f32 %v485, %v495
  %v507 = vadd.f32 %v486, %v495
  %v508 = vadd.f32 %v487, %v500
  %v509 = vadd.f32 %v488, %v500
  %v510 = vmul.f32 %v503, 0.5
  %v511 = vmul.f32 %v505, 0.5
  %v512 = vmul.f32 %v507, 0.5
  %v513 = vmul.f32 %v509, 0.5
  %v514 = vtanh.pop %v510
  %v515 = vtanh.pop %v511
  %v516 = vtanh.pop %v512
  %v517 = vtanh.pop %v513
  %v518 = vadd.f32 %v514, 1.0
  %v519 = vadd.f32 %v515, 1.0
  %v520 = vadd.f32 %v516, 1.0
  %v521 = vadd.f32 %v517, 1.0
  %v522 = vmul.f32 %v518, 0.5
  %v523 = vmul.f32 %v519, 0.5
  %v524 = vmul.f32 %v520, 0.5
  %v525 = vmul.f32 %v521, 0.5
  %v526 = vmul.f32 %v502, %v522
  %v527 = vmul.f32 %v504, %v523
  %v528 = vmul.f32 %v506, %v524
  %v529 = vmul.f32 %v508, %v525
  %v530 = vadd.f32 %v526, %v275
  %v531 = vadd.f32 %v527, %v276
  %v532 = vadd.f32 %v528, %v277
  %v533 = vadd.f32 %v529, %v278
  %v534 = vmul.f32 %v530, 0.70710677
  %v535 = vmul.f32 %v531, 0.70710677
  %v536 = vmul.f32 %v532, 0.70710677
  %v537 = vmul.f32 %v533, 0.70710677
  %538 = vst [vmem:[%s5] sm:$0xff] %v534
  %539 = vst [vmem:[%s5 + $0x8] sm:$0xff] %v535
  %540 = vst [vmem:[%s5 + $0x10] sm:$0xff] %v536
  %541 = vst [vmem:[%s5 + $0x18] sm:$0xff] %v537
  // Predicated region
  $region22: #{feature_transformer.1} parent=0 // pred_check
    _
  $region23: #{feature_transformer.1} parent=0 // pred_check_branch
    %543 = sbr.rel (0) target = $region25
  $region24: #{feature_transformer.1} parent=0 // pred_region
    _
  $region25: #{feature_transformer.1} parent=0 // pred_fallthru
    _
  // Predicated region
  $region26: #{feature_transformer.1} parent=0 // pred_check
    _
  $region27: #{feature_transformer.1} parent=0 // pred_check_branch
    %545 = sbr.rel (0) target = $region29
  $region28: #{feature_transformer.1} parent=0 // pred_region
    _
  $region29: #{feature_transformer.1} parent=0 // pred_fallthru
    _

</llo_original>
